<compile_context>
chip_gen: v7x
topology: tpu7x:2x2x1
jax: 0.10.0
libtpu: 0.0.40
codegen_flags: <defaults>
</compile_context>

<pallas_src>
import jax
import jax.numpy as jnp
from jax import lax
from jax.experimental import pallas as pl
from jax.experimental.pallas import tpu as pltpu


def _round_up(x, m):
    return ((x + m - 1) // m) * m


def _cdiv(a, b):
    return (a + b - 1) // b


def _make_mlp_kernel(n_layers, sub, n_sub):
    """Fused kernel running all layers over one [tile, input_dim] block.

    Ref layout:
      x_ref : [tile, input_dim] bf16   (torch-native, batch-major)
      wK    : [out_k, in_k]     bf16   (torch-native [out, in])
      bK    : [out_k, 1]        f32
      o_ref : [out_dim, tile]   f32    (lane-dense output)

    The block is split into `n_sub` lane sub-slices of width `sub`; the full
    MLP is computed per sub-slice so activations stay in registers.
    """

    def kernel(*refs):
        x_ref = refs[0]
        o_ref = refs[-1]
        wb = refs[1:-1]

        def body(j, carry):
            start = pl.multiple_of(j * sub, sub)
            xs = x_ref[pl.ds(start, sub), :]                    # [sub, in] bf16
            # Layer 0: contract last dims -> [h0, sub]; MXU absorbs transpose.
            acc = lax.dot_general(
                wb[0][...], xs, (((1,), (1,)), ((), ())),
                preferred_element_type=jnp.float32) + wb[1][...]
            for li in range(1, n_layers):
                # cast-then-bf16-ReLU epilogue (equivalent to f32-max-then-cast)
                h = jnp.maximum(acc.astype(jnp.bfloat16), 0)
                acc = jnp.dot(wb[2 * li][...], h,
                              preferred_element_type=jnp.float32)
                acc = acc + wb[2 * li + 1][...]
            o_ref[:, pl.ds(start, sub)] = acc.astype(o_ref.dtype)
            return carry

        lax.fori_loop(0, n_sub, body, 0, unroll=(n_sub <= 4))

    return kernel


def reward_model_forward(x, params, *, max_batch_tile=8192, sub_tile=256):
    """Run the Reward_Model forward pass as a single fused Pallas kernel.

    x       : [B, input_dim] float32
    params  : list of (W, b) tuples in torch layout, W: [out, in], b: [out]
    returns : [B, out_dim] float32
    """
    B, input_dim = x.shape
    n_layers = len(params)
    out_dim = params[-1][0].shape[0]
    assert max_batch_tile % 128 == 0 and sub_tile % 128 == 0

    # ---- batch tiling -------------------------------------------------------
    B128 = _round_up(B, 128)                 # minimal lane padding
    sub = min(sub_tile, B128)                # in-kernel sub-slice width (x128)
    n_steps = max(1, _cdiv(B128, max_batch_tile))
    if B128 >= 2 * sub:                      # >=2 parallel steps -> use both v7x TCs
        n_steps = max(n_steps, 2)
    tile = _round_up(_cdiv(B128, n_steps), sub)   # tile is a multiple of sub
    padded_B = n_steps * tile                # pads at most ~sub per step, not a full tile
    n_sub = tile // sub

    # ---- wrapper-side data movement: cast to bf16 first, pad batch, no transpose
    x_bf = x.astype(jnp.bfloat16)
    if padded_B != B:
        x_bf = jnp.pad(x_bf, ((0, padded_B - B), (0, 0)))

    # Flatten params into W1, b1, W2, b2, ...  (W: bf16 [out,in], b: f32 [out,1])
    flat = []
    for (W, b) in params:
        flat.append(W.astype(jnp.bfloat16))
        flat.append(b.reshape(-1, 1).astype(jnp.float32))

    def _const_spec(arr):
        nd = arr.ndim
        return pl.BlockSpec(arr.shape, lambda i, _nd=nd: (0,) * _nd)

    in_specs = [pl.BlockSpec((tile, input_dim), lambda i: (i, 0))]
    in_specs += [_const_spec(a) for a in flat]
    out_specs = pl.BlockSpec((out_dim, tile), lambda i: (0, i))

    fn = pl.pallas_call(
        _make_mlp_kernel(n_layers, sub, n_sub),
        out_shape=jax.ShapeDtypeStruct((out_dim, padded_B), jnp.float32),
        grid_spec=pltpu.PrefetchScalarGridSpec(
            num_scalar_prefetch=0,
            grid=(n_steps,),
            in_specs=in_specs,
            out_specs=out_specs,
        ),
        compiler_params=pltpu.CompilerParams(
            dimension_semantics=("parallel",),
        ),
    )
    out_t = fn(x_bf, *flat)              # [out_dim, padded_B] f32
    return jnp.transpose(out_t)[:B, :]   # [B, out_dim]


def init_params(key, input_dim, hidden_dim, output_dim, n_layers):
    """Kaiming-normal weights (torch layout [out, in]); biases zero."""
    dims = [input_dim] + [hidden_dim] * (n_layers - 1) + [output_dim]
    params = []
    for li in range(n_layers):
        key, wk = jax.random.split(key)
        fan_in = dims[li]
        std = jnp.sqrt(2.0 / fan_in)
        W = jax.random.normal(wk, (dims[li + 1], dims[li]), dtype=jnp.float32) * std
        b = jnp.zeros((dims[li + 1],), dtype=jnp.float32)
        params.append((W, b))
    return params


def reference_forward(x, params):
    """Pure-JAX reference of the same MLP (torch-layout weights)."""
    h = x
    n = len(params)
    for i, (W, b) in enumerate(params):
        h = h @ W.T + b
        if i < n - 1:
            h = jnp.maximum(h, 0.0)
    return h


if __name__ == "__main__":
    # Shapes consistent with the module defaults: n_layers=5, hidden_dim=64, out=1.
    batch = 16
    input_dim = 32
    hidden_dim = 64
    output_dim = 1
    n_layers = 5

    key = jax.random.PRNGKey(0)
    key, xk = jax.random.split(key)
    x = jax.random.normal(xk, (batch, input_dim), dtype=jnp.float32)
    params = init_params(key, input_dim, hidden_dim, output_dim, n_layers)

    out = jax.block_until_ready(reward_model_forward(x, params))

    # Reference with the same bf16-quantized x/weights (f32 compute); remaining
    # discrepancy is the kernel's per-layer bf16 activation recast.
    x_q = x.astype(jnp.bfloat16).astype(jnp.float32)
    params_q = [(W.astype(jnp.bfloat16).astype(jnp.float32), b) for (W, b) in params]
    ref = reference_forward(x_q, params_q)

    assert out.shape == (batch, output_dim)
    assert jnp.allclose(out, ref, atol=5e-2, rtol=5e-2), "mismatch vs reference (small)"

    # Larger batch: exercises multi-step parallel grid, batch padding and the
    # in-kernel sub-slice fori_loop.
    key, xk2 = jax.random.split(key)
    x2 = jax.random.normal(xk2, (700, input_dim), dtype=jnp.float32)
    out2 = jax.block_until_ready(reward_model_forward(x2, params))
    ref2 = reference_forward(x2.astype(jnp.bfloat16).astype(jnp.float32), params_q)
    assert out2.shape == (700, output_dim)
    assert jnp.allclose(out2, ref2, atol=5e-2, rtol=5e-2), "mismatch vs reference (large)"

    print("KERNEL_OK")
</pallas_src>

<mosaic_0001>
module attributes {stable_mosaic.version = 11 : i64} {
  func.func @kernel(%arg0: i32, %arg1: memref<128x32xbf16, #tpu.memory_space<vmem>>, %arg2: memref<64x32xbf16, #tpu.memory_space<vmem>>, %arg3: memref<64x1xf32, #tpu.memory_space<vmem>>, %arg4: memref<64x64xbf16, #tpu.memory_space<vmem>>, %arg5: memref<64x1xf32, #tpu.memory_space<vmem>>, %arg6: memref<64x64xbf16, #tpu.memory_space<vmem>>, %arg7: memref<64x1xf32, #tpu.memory_space<vmem>>, %arg8: memref<64x64xbf16, #tpu.memory_space<vmem>>, %arg9: memref<64x1xf32, #tpu.memory_space<vmem>>, %arg10: memref<1x64xbf16, #tpu.memory_space<vmem>>, %arg11: memref<1x1xf32, #tpu.memory_space<vmem>>, %arg12: memref<1x128xf32, #tpu.memory_space<vmem>>) attributes {dimension_semantics = [#tpu.dimension_semantics<parallel>], iteration_bounds = array<i64: 1>, scalar_prefetch = 0 : i64, scratch_operands = 0 : i64, tpu.core_type = #tpu.core_type<tc>, window_params = [{transform_indices = @transform_0, window_bounds = array<i64: 128, 32>}, {pipeline_mode = #tpu.pipeline_mode<synchronous>, transform_indices = @transform_1, window_bounds = array<i64: 64, 32>}, {pipeline_mode = #tpu.pipeline_mode<synchronous>, transform_indices = @transform_2, window_bounds = array<i64: 64, 1>}, {pipeline_mode = #tpu.pipeline_mode<synchronous>, transform_indices = @transform_3, window_bounds = array<i64: 64, 64>}, {pipeline_mode = #tpu.pipeline_mode<synchronous>, transform_indices = @transform_4, window_bounds = array<i64: 64, 1>}, {pipeline_mode = #tpu.pipeline_mode<synchronous>, transform_indices = @transform_5, window_bounds = array<i64: 64, 64>}, {pipeline_mode = #tpu.pipeline_mode<synchronous>, transform_indices = @transform_6, window_bounds = array<i64: 64, 1>}, {pipeline_mode = #tpu.pipeline_mode<synchronous>, transform_indices = @transform_7, window_bounds = array<i64: 64, 64>}, {pipeline_mode = #tpu.pipeline_mode<synchronous>, transform_indices = @transform_8, window_bounds = array<i64: 64, 1>}, {pipeline_mode = #tpu.pipeline_mode<synchronous>, transform_indices = @transform_9, window_bounds = array<i64: 1, 64>}, {pipeline_mode = #tpu.pipeline_mode<synchronous>, transform_indices = @transform_10, window_bounds = array<i64: 1, 1>}, {transform_indices = @transform_11, window_bounds = array<i64: 1, 128>}]} {
    %c0_i32 = arith.constant 0 : i32
    %c128_i32 = arith.constant 128 : i32
    %0 = arith.muli %c0_i32, %c128_i32 : i32
    %1 = tpu.assume_multiple %0, 128 : i32
    %2 = arith.index_cast %1 : i32 to index
    %c0 = arith.constant 0 : index
    %3 = vector.load %arg1[%2, %c0] : memref<128x32xbf16, #tpu.memory_space<vmem>>, vector<128x32xbf16>
    %c0_0 = arith.constant 0 : index
    %c0_1 = arith.constant 0 : index
    %4 = vector.load %arg2[%c0_0, %c0_1] : memref<64x32xbf16, #tpu.memory_space<vmem>>, vector<64x32xbf16>
    %cst = arith.constant dense<0.000000e+00> : vector<64x128xf32>
    %5 = tpu.matmul %4, %3, %cst {dimension_numbers = #tpu.dot_dimension_numbers<[1], [1], [0], [0], [0, 0, 1, 0], [], []>} : vector<64x32xbf16>, vector<128x32xbf16>, vector<64x128xf32> -> vector<64x128xf32>
    %c0_2 = arith.constant 0 : index
    %c0_3 = arith.constant 0 : index
    %6 = vector.load %arg3[%c0_2, %c0_3] : memref<64x1xf32, #tpu.memory_space<vmem>>, vector<64x1xf32>
    %7 = vector.broadcast %6 : vector<64x1xf32> to vector<64x128xf32>
    %8 = arith.addf %5, %7 : vector<64x128xf32>
    %9 = arith.truncf %8 : vector<64x128xf32> to vector<64x128xbf16>
    %cst_4 = arith.constant 0.000000e+00 : bf16
    %10 = vector.broadcast %cst_4 : bf16 to vector<64x128xbf16>
    %11 = arith.maximumf %9, %10 : vector<64x128xbf16>
    %c0_5 = arith.constant 0 : index
    %c0_6 = arith.constant 0 : index
    %12 = vector.load %arg4[%c0_5, %c0_6] : memref<64x64xbf16, #tpu.memory_space<vmem>>, vector<64x64xbf16>
    %cst_7 = arith.constant dense<0.000000e+00> : vector<64x128xf32>
    %13 = tpu.matmul %12, %11, %cst_7 {dimension_numbers = #tpu.dot_dimension_numbers<[1], [0], [0], [1], [0, 0, 1, 1], [], []>} : vector<64x64xbf16>, vector<64x128xbf16>, vector<64x128xf32> -> vector<64x128xf32>
    %c0_8 = arith.constant 0 : index
    %c0_9 = arith.constant 0 : index
    %14 = vector.load %arg5[%c0_8, %c0_9] : memref<64x1xf32, #tpu.memory_space<vmem>>, vector<64x1xf32>
    %15 = vector.broadcast %14 : vector<64x1xf32> to vector<64x128xf32>
    %16 = arith.addf %13, %15 : vector<64x128xf32>
    %17 = arith.truncf %16 : vector<64x128xf32> to vector<64x128xbf16>
    %cst_10 = arith.constant 0.000000e+00 : bf16
    %18 = vector.broadcast %cst_10 : bf16 to vector<64x128xbf16>
    %19 = arith.maximumf %17, %18 : vector<64x128xbf16>
    %c0_11 = arith.constant 0 : index
    %c0_12 = arith.constant 0 : index
    %20 = vector.load %arg6[%c0_11, %c0_12] : memref<64x64xbf16, #tpu.memory_space<vmem>>, vector<64x64xbf16>
    %cst_13 = arith.constant dense<0.000000e+00> : vector<64x128xf32>
    %21 = tpu.matmul %20, %19, %cst_13 {dimension_numbers = #tpu.dot_dimension_numbers<[1], [0], [0], [1], [0, 0, 1, 1], [], []>} : vector<64x64xbf16>, vector<64x128xbf16>, vector<64x128xf32> -> vector<64x128xf32>
    %c0_14 = arith.constant 0 : index
    %c0_15 = arith.constant 0 : index
    %22 = vector.load %arg7[%c0_14, %c0_15] : memref<64x1xf32, #tpu.memory_space<vmem>>, vector<64x1xf32>
    %23 = vector.broadcast %22 : vector<64x1xf32> to vector<64x128xf32>
    %24 = arith.addf %21, %23 : vector<64x128xf32>
    %25 = arith.truncf %24 : vector<64x128xf32> to vector<64x128xbf16>
    %cst_16 = arith.constant 0.000000e+00 : bf16
    %26 = vector.broadcast %cst_16 : bf16 to vector<64x128xbf16>
    %27 = arith.maximumf %25, %26 : vector<64x128xbf16>
    %c0_17 = arith.constant 0 : index
    %c0_18 = arith.constant 0 : index
    %28 = vector.load %arg8[%c0_17, %c0_18] : memref<64x64xbf16, #tpu.memory_space<vmem>>, vector<64x64xbf16>
    %cst_19 = arith.constant dense<0.000000e+00> : vector<64x128xf32>
    %29 = tpu.matmul %28, %27, %cst_19 {dimension_numbers = #tpu.dot_dimension_numbers<[1], [0], [0], [1], [0, 0, 1, 1], [], []>} : vector<64x64xbf16>, vector<64x128xbf16>, vector<64x128xf32> -> vector<64x128xf32>
    %c0_20 = arith.constant 0 : index
    %c0_21 = arith.constant 0 : index
    %30 = vector.load %arg9[%c0_20, %c0_21] : memref<64x1xf32, #tpu.memory_space<vmem>>, vector<64x1xf32>
    %31 = vector.broadcast %30 : vector<64x1xf32> to vector<64x128xf32>
    %32 = arith.addf %29, %31 : vector<64x128xf32>
    %33 = arith.truncf %32 : vector<64x128xf32> to vector<64x128xbf16>
    %cst_22 = arith.constant 0.000000e+00 : bf16
    %34 = vector.broadcast %cst_22 : bf16 to vector<64x128xbf16>
    %35 = arith.maximumf %33, %34 : vector<64x128xbf16>
    %c0_23 = arith.constant 0 : index
    %c0_24 = arith.constant 0 : index
    %36 = vector.load %arg10[%c0_23, %c0_24] : memref<1x64xbf16, #tpu.memory_space<vmem>>, vector<1x64xbf16>
    %cst_25 = arith.constant dense<0.000000e+00> : vector<1x128xf32>
    %37 = tpu.matmul %36, %35, %cst_25 {dimension_numbers = #tpu.dot_dimension_numbers<[1], [0], [0], [1], [0, 0, 1, 1], [], []>} : vector<1x64xbf16>, vector<64x128xbf16>, vector<1x128xf32> -> vector<1x128xf32>
    %c0_26 = arith.constant 0 : index
    %c0_27 = arith.constant 0 : index
    %38 = vector.load %arg11[%c0_26, %c0_27] : memref<1x1xf32, #tpu.memory_space<vmem>>, vector<1x1xf32>
    %39 = vector.broadcast %38 : vector<1x1xf32> to vector<1x128xf32>
    %40 = arith.addf %37, %39 : vector<1x128xf32>
    %c0_28 = arith.constant 0 : index
    %41 = arith.index_cast %1 : i32 to index
    %42 = vector.load %arg12[%c0_28, %41] : memref<1x128xf32, #tpu.memory_space<vmem>>, vector<1x128xf32>
    tpu.vector_store %arg12[%c0_28, %41], %40 {strides = array<i32>} : memref<1x128xf32, #tpu.memory_space<vmem>>, vector<1x128xf32>,
    %c1_i32 = arith.constant 1 : i32
    return
  }
  func.func @transform_0(%arg0: i32) -> (i32, i32) {
    %c0_i32 = arith.constant 0 : i32
    %c0_i32_0 = arith.constant 0 : i32
    return %arg0, %c0_i32 : i32, i32
  }
  func.func @transform_1(%arg0: i32) -> (i32, i32) {
    %c0_i32 = arith.constant 0 : i32
    %c0_i32_0 = arith.constant 0 : i32
    %c0_i32_1 = arith.constant 0 : i32
    return %c0_i32, %c0_i32_0 : i32, i32
  }
  func.func @transform_2(%arg0: i32) -> (i32, i32) {
    %c0_i32 = arith.constant 0 : i32
    %c0_i32_0 = arith.constant 0 : i32
    %c0_i32_1 = arith.constant 0 : i32
    return %c0_i32, %c0_i32_0 : i32, i32
  }
  func.func @transform_3(%arg0: i32) -> (i32, i32) {
    %c0_i32 = arith.constant 0 : i32
    %c0_i32_0 = arith.constant 0 : i32
    %c0_i32_1 = arith.constant 0 : i32
    return %c0_i32, %c0_i32_0 : i32, i32
  }
  func.func @transform_4(%arg0: i32) -> (i32, i32) {
    %c0_i32 = arith.constant 0 : i32
    %c0_i32_0 = arith.constant 0 : i32
    %c0_i32_1 = arith.constant 0 : i32
    return %c0_i32, %c0_i32_0 : i32, i32
  }
  func.func @transform_5(%arg0: i32) -> (i32, i32) {
    %c0_i32 = arith.constant 0 : i32
    %c0_i32_0 = arith.constant 0 : i32
    %c0_i32_1 = arith.constant 0 : i32
    return %c0_i32, %c0_i32_0 : i32, i32
  }
  func.func @transform_6(%arg0: i32) -> (i32, i32) {
    %c0_i32 = arith.constant 0 : i32
    %c0_i32_0 = arith.constant 0 : i32
    %c0_i32_1 = arith.constant 0 : i32
    return %c0_i32, %c0_i32_0 : i32, i32
  }
  func.func @transform_7(%arg0: i32) -> (i32, i32) {
    %c0_i32 = arith.constant 0 : i32
    %c0_i32_0 = arith.constant 0 : i32
    %c0_i32_1 = arith.constant 0 : i32
    return %c0_i32, %c0_i32_0 : i32, i32
  }
  func.func @transform_8(%arg0: i32) -> (i32, i32) {
    %c0_i32 = arith.constant 0 : i32
    %c0_i32_0 = arith.constant 0 : i32
    %c0_i32_1 = arith.constant 0 : i32
    return %c0_i32, %c0_i32_0 : i32, i32
  }
  func.func @transform_9(%arg0: i32) -> (i32, i32) {
    %c0_i32 = arith.constant 0 : i32
    %c0_i32_0 = arith.constant 0 : i32
    %c0_i32_1 = arith.constant 0 : i32
    return %c0_i32, %c0_i32_0 : i32, i32
  }
  func.func @transform_10(%arg0: i32) -> (i32, i32) {
    %c0_i32 = arith.constant 0 : i32
    %c0_i32_0 = arith.constant 0 : i32
    %c0_i32_1 = arith.constant 0 : i32
    return %c0_i32, %c0_i32_0 : i32, i32
  }
  func.func @transform_11(%arg0: i32) -> (i32, i32) {
    %c0_i32 = arith.constant 0 : i32
    %c0_i32_0 = arith.constant 0 : i32
    return %c0_i32, %arg0 : i32, i32
  }
}

</mosaic_0001>

<llo_original>
// kernel: tpu_custom_call.1
$region0: #{tpu_custom_call.1}
  #allocation0 [shape = 'u32[]', space=smem, size = 0x4, offset = 0x4, fixed_abs, tag = 'smem constant byte address 0x4 - core index']
  #allocation1 [shape = 'u32[144,128]{1,0:T(1,128)}', space=vmem, size = 0x12000, scoped, tag = 'internal scratch']
  #allocation2 [shape = 'f32[1,1]{1,0:T(1,128)S(1)}', space=vmem, size = 0x200, scoped, tag = 'scoped memory for tpu_custom_call.1']
  %s0 = inlined_call_operand.vmem [shape: bf16[128,32], index: 0, kind: input, shape index: {}]
  %s1 = inlined_call_operand.vmem [shape: bf16[64,32], index: 1, kind: input, shape index: {}]
  %s2 = inlined_call_operand.vmem [shape: f32[64,1], index: 2, kind: input, shape index: {}]
  %s3 = inlined_call_operand.vmem [shape: bf16[64,64], index: 3, kind: input, shape index: {}]
  %s4 = inlined_call_operand.vmem [shape: f32[64,1], index: 4, kind: input, shape index: {}]
  %s5 = inlined_call_operand.vmem [shape: bf16[64,64], index: 5, kind: input, shape index: {}]
  %s6 = inlined_call_operand.vmem [shape: f32[64,1], index: 6, kind: input, shape index: {}]
  %s7 = inlined_call_operand.vmem [shape: bf16[64,64], index: 7, kind: input, shape index: {}]
  %s8 = inlined_call_operand.vmem [shape: f32[64,1], index: 8, kind: input, shape index: {}]
  %s9 = inlined_call_operand.vmem [shape: bf16[1,64], index: 9, kind: input, shape index: {}]
  %s10 = inlined_call_operand.<no memory space> [shape: f32[1,1], index: 10, kind: input, shape index: {}]
  %s11 = inlined_call_operand.hbm [shape: f32[1,128], index: 11, kind: output, shape index: {}]
  %s12 = sld [smem:[#allocation0]]
  $region54: #{tpu_custom_call.1} parent=0
    _
  %s14 = ssub.s32 1, %s12
  %s15 = scalar_select 0, %s14, %s12
  %v16 = vstv %s10
  %17 = vst [vmem:[#allocation2] sm:$0x1] %v16
  $region1: #{tpu_custom_call.1} parent=0
    #allocation3 [shape = 'u8[512]{0}', space=vmem, size = 0x400, scoped, tag = 'output window, operand 0, single buffered']
    #allocation4 [shape = 's32[1]{0}', space=sflag, size = 0x4, scoped, tag = 'scoped memory for tpu_custom_call.1']
    %18 = vsyncpa [#allocation4], 0
    // Predicated region
    $region2: #{tpu_custom_call.1} parent=1 // pred_check
      _
    $region3: #{tpu_custom_call.1} parent=1 // pred_check_branch
      %20 = sbr.rel (0) target = $region5
    $region4: #{tpu_custom_call.1} parent=1 // pred_region
      _
    $region5: #{tpu_custom_call.1} parent=1 // pred_fallthru
      _
    // Predicated region
    $region6: #{tpu_custom_call.1} parent=1 // pred_check
      _
    $region7: #{tpu_custom_call.1} parent=1 // pred_check_branch
      %22 = sbr.rel (0) target = $region9
    $region8: #{tpu_custom_call.1} parent=1 // pred_region
      _
    $region9: #{tpu_custom_call.1} parent=1 // pred_fallthru
      _
    // Predicated region
    $region10: #{tpu_custom_call.1} parent=1 // pred_check
      _
    $region11: #{tpu_custom_call.1} parent=1 // pred_check_branch
      %24 = sbr.rel (0) target = $region13
    $region12: #{tpu_custom_call.1} parent=1 // pred_region
      _
    $region13: #{tpu_custom_call.1} parent=1 // pred_fallthru
      _
    // Predicated region
    $region14: #{tpu_custom_call.1} parent=1 // pred_check
      _
    $region15: #{tpu_custom_call.1} parent=1 // pred_check_branch
      %26 = sbr.rel (0) target = $region17
    $region16: #{tpu_custom_call.1} parent=1 // pred_region
      _
    $region17: #{tpu_custom_call.1} parent=1 // pred_fallthru
      _
    // Predicated region
    $region18: #{tpu_custom_call.1} parent=1 // pred_check
      _
    $region19: #{tpu_custom_call.1} parent=1 // pred_check_branch
      %28 = sbr.rel (0) target = $region21
    $region20: #{tpu_custom_call.1} parent=1 // pred_region
      _
    $region21: #{tpu_custom_call.1} parent=1 // pred_fallthru
      _
    // Predicated region
    $region22: #{tpu_custom_call.1} parent=1 // pred_check
      _
    $region23: #{tpu_custom_call.1} parent=1 // pred_check_branch
      %30 = sbr.rel (0) target = $region25
    $region24: #{tpu_custom_call.1} parent=1 // pred_region
      _
    $region25: #{tpu_custom_call.1} parent=1 // pred_fallthru
      _
    // Predicated region
    $region26: #{tpu_custom_call.1} parent=1 // pred_check
      _
    $region27: #{tpu_custom_call.1} parent=1 // pred_check_branch
      %32 = sbr.rel (0) target = $region29
    $region28: #{tpu_custom_call.1} parent=1 // pred_region
      _
    $region29: #{tpu_custom_call.1} parent=1 // pred_fallthru
      _
    // Predicated region
    $region30: #{tpu_custom_call.1} parent=1 // pred_check
      _
    $region31: #{tpu_custom_call.1} parent=1 // pred_check_branch
      %34 = sbr.rel (0) target = $region33
    $region32: #{tpu_custom_call.1} parent=1 // pred_region
      _
    $region33: #{tpu_custom_call.1} parent=1 // pred_fallthru
      _
    // Predicated region
    $region34: #{tpu_custom_call.1} parent=1 // pred_check
      _
    $region35: #{tpu_custom_call.1} parent=1 // pred_check_branch
      %36 = sbr.rel (0) target = $region37
    $region36: #{tpu_custom_call.1} parent=1 // pred_region
      _
    $region37: #{tpu_custom_call.1} parent=1 // pred_fallthru
      _
    // Predicated region
    $region38: #{tpu_custom_call.1} parent=1 // pred_check
      _
    $region39: #{tpu_custom_call.1} parent=1 // pred_check_branch
      %38 = sbr.rel (0) target = $region41
    $region40: #{tpu_custom_call.1} parent=1 // pred_region
      _
    $region41: #{tpu_custom_call.1} parent=1 // pred_fallthru
      _
    // Predicated region
    $region42: #{tpu_custom_call.1} parent=1 // pred_check
      _
    $region43: #{tpu_custom_call.1} parent=1 // pred_check_branch
      %40 = sbr.rel (0) target = $region45
    $region44: #{tpu_custom_call.1} parent=1 // pred_region
      _
    $region45: #{tpu_custom_call.1} parent=1 // pred_fallthru
      _
    %v42 = vld [vmem:[%s0] sm:$0xf]
    %v43 = vld [vmem:[%s0 + $0x4] sm:$0xf]
    %v44 = vld [vmem:[%s0 + $0x8] sm:$0xf]
    %v45 = vld [vmem:[%s0 + $0xc] sm:$0xf]
    %v46 = vld [vmem:[%s0 + $0x10] sm:$0xf]
    %v47 = vld [vmem:[%s0 + $0x14] sm:$0xf]
    %v48 = vld [vmem:[%s0 + $0x18] sm:$0xf]
    %v49 = vld [vmem:[%s0 + $0x1c] sm:$0xf]
    %v50 = vld [vmem:[%s0 + $0x20] sm:$0xf]
    %v51 = vld [vmem:[%s0 + $0x24] sm:$0xf]
    %v52 = vld [vmem:[%s0 + $0x28] sm:$0xf]
    %v53 = vld [vmem:[%s0 + $0x2c] sm:$0xf]
    %v54 = vld [vmem:[%s0 + $0x30] sm:$0xf]
    %v55 = vld [vmem:[%s0 + $0x34] sm:$0xf]
    %v56 = vld [vmem:[%s0 + $0x38] sm:$0xf]
    %v57 = vld [vmem:[%s0 + $0x3c] sm:$0xf]
    %v58 = vld [vmem:[%s1] sm:$0xf]
    %v59 = vld [vmem:[%s1 + $0x4] sm:$0xf]
    %v60 = vld [vmem:[%s1 + $0x8] sm:$0xf]
    %v61 = vld [vmem:[%s1 + $0xc] sm:$0xf]
    %v62 = vld [vmem:[%s1 + $0x10] sm:$0xf]
    %v63 = vld [vmem:[%s1 + $0x14] sm:$0xf]
    %v64 = vld [vmem:[%s1 + $0x18] sm:$0xf]
    %v65 = vld [vmem:[%s1 + $0x1c] sm:$0xf]
    %v66 = vld [vmem:[%s2] sm:$0xff]
    %v67 = vld [vmem:[%s2 + $0x8] sm:$0xff]
    %v68 = vld [vmem:[%s2 + $0x10] sm:$0xff]
    %v69 = vld [vmem:[%s2 + $0x18] sm:$0xff]
    %v70 = vld [vmem:[%s2 + $0x20] sm:$0xff]
    %v71 = vld [vmem:[%s2 + $0x28] sm:$0xff]
    %v72 = vld [vmem:[%s2 + $0x30] sm:$0xff]
    %v73 = vld [vmem:[%s2 + $0x38] sm:$0xff]
    %75 = vset.pattern.permute.xlu0 0
    %76 = vperm.xlu0 %75, %v66
    %v77 = vpop.permute.xlu0 %76
    %80 = vset.pattern.permute.xlu0 0
    %81 = vperm.xlu0 %80, %v67
    %v82 = vpop.permute.xlu0 %81
    %85 = vset.pattern.permute.xlu0 0
    %86 = vperm.xlu0 %85, %v68
    %v87 = vpop.permute.xlu0 %86
    %90 = vset.pattern.permute.xlu0 0
    %91 = vperm.xlu0 %90, %v69
    %v92 = vpop.permute.xlu0 %91
    %95 = vset.pattern.permute.xlu0 0
    %96 = vperm.xlu0 %95, %v70
    %v97 = vpop.permute.xlu0 %96
    %100 = vset.pattern.permute.xlu0 0
    %101 = vperm.xlu0 %100, %v71
    %v102 = vpop.permute.xlu0 %101
    %105 = vset.pattern.permute.xlu0 0
    %106 = vperm.xlu0 %105, %v72
    %v107 = vpop.permute.xlu0 %106
    %110 = vset.pattern.permute.xlu0 0
    %111 = vperm.xlu0 %110, %v73
    %v112 = vpop.permute.xlu0 %111
    %v122 = vunpack.c.l.b16 %v58
    %v123 = vunpack.c.l.b16 %v59
    %v124 = vunpack.c.l.b16 %v60
    %v125 = vunpack.c.l.b16 %v61
    %v126 = vunpack.c.l.b16 %v62
    %v127 = vunpack.c.l.b16 %v63
    %v128 = vunpack.c.l.b16 %v64
    %v129 = vunpack.c.l.b16 %v65
    %v130 = vpack.c.b16 %v123, %v122
    %v131 = vpack.c.b16 %v125, %v124
    %v132 = vpack.c.b16 %v127, %v126
    %v133 = vpack.c.b16 %v129, %v128
    %v150 = vunpack.c.l.b16 %v42
    %v151 = vunpack.c.l.b16 %v43
    %v152 = vunpack.c.l.b16 %v44
    %v153 = vunpack.c.l.b16 %v45
    %v154 = vunpack.c.l.b16 %v46
    %v155 = vunpack.c.l.b16 %v47
    %v156 = vunpack.c.l.b16 %v48
    %v157 = vunpack.c.l.b16 %v49
    %v158 = vunpack.c.l.b16 %v50
    %v159 = vunpack.c.l.b16 %v51
    %v160 = vunpack.c.l.b16 %v52
    %v161 = vunpack.c.l.b16 %v53
    %v162 = vunpack.c.l.b16 %v54
    %v163 = vunpack.c.l.b16 %v55
    %v164 = vunpack.c.l.b16 %v56
    %v165 = vunpack.c.l.b16 %v57
    %v166 = vpack.c.b16 %v151, %v150
    %v167 = vpack.c.b16 %v153, %v152
    %v168 = vpack.c.b16 %v155, %v154
    %v169 = vpack.c.b16 %v157, %v156
    %v170 = vpack.c.b16 %v159, %v158
    %v171 = vpack.c.b16 %v161, %v160
    %v172 = vpack.c.b16 %v163, %v162
    %v173 = vpack.c.b16 %v165, %v164
    %vm174 = vcmask 261120
    %v176 = vsel %vm174, %v130, 0
    %v179 = vsel %vm174, %v131, 0
    %v182 = vsel %vm174, %v132, 0
    %v185 = vsel %vm174, %v133, 0
    %v188 = vsel %vm174, %v166, 0
    %v191 = vsel %vm174, %v167, 0
    %v194 = vsel %vm174, %v168, 0
    %v197 = vsel %vm174, %v169, 0
    %v200 = vsel %vm174, %v170, 0
    %v203 = vsel %vm174, %v171, 0
    %v206 = vsel %vm174, %v172, 0
    %v209 = vsel %vm174, %v173, 0
    %211 = vmatprep.subr.bf16.mxu0 0
    %212 = vmatpush1.bf16.xpose.msra.mxu0 %v188
    %213 = vmatprep.subr.bf16.mxu0 0
    %214 = vmatpush1.bf16.xpose.msra.mxu0 %v191
    %215 = vmatprep.subr.bf16.mxu0 0
    %216 = vmatpush1.bf16.xpose.msra.mxu0 %v194
    %217 = vmatprep.subr.bf16.mxu0 0
    %218 = vmatpush1.bf16.xpose.msra.mxu0 %v197
    %219 = vmatprep.subr.bf16.mxu0 0
    %220 = vmatpush1.bf16.xpose.msra.mxu0 %v200
    %221 = vmatprep.subr.bf16.mxu0 0
    %222 = vmatpush1.bf16.xpose.msra.mxu0 %v203
    %223 = vmatprep.subr.bf16.mxu0 0
    %224 = vmatpush1.bf16.xpose.msra.mxu0 %v206
    %225 = vmatprep.subr.bf16.mxu0 0
    %226 = vmatpush1.bf16.xpose.msra.mxu0 %v209
    %227 = vmatprep.subr.bf16.mxu0 0
    %228 = vmatpush1.bf16.xpose.msra.mxu0 0
    %229 = vmatprep.subr.bf16.mxu0 0
    %230 = vmatpush1.bf16.xpose.msra.mxu0 0
    %231 = vmatprep.subr.bf16.mxu0 0
    %232 = vmatpush1.bf16.xpose.msra.mxu0 0
    %233 = vmatprep.subr.bf16.mxu0 0
    %234 = vmatpush1.bf16.xpose.msra.mxu0 0
    %235 = vmatprep.subr.bf16.mxu0 0
    %236 = vmatpush1.bf16.xpose.msra.mxu0 0
    %237 = vmatprep.subr.bf16.mxu0 0
    %238 = vmatpush1.bf16.xpose.msra.mxu0 0
    %239 = vmatprep.subr.bf16.mxu0 0
    %240 = vmatpush1.bf16.xpose.msra.mxu0 0
    %241 = vmatprep.subr.bf16.mxu0 0
    %242 = vmatpush1.bf16.xpose.msra.mxu0 0
    %243 = vmatprep.mubr.bf16.mxu0 0
    %244 = vmatmul.mubr.bf16.gmra.mrb[0].mxu0 %v176
    %v245 = vpop.f32.mrb[0].mxu0
    %v246 = vadd.f32 %v77, %v245
    %v247 = vpop.f32.mrb[0].mxu0
    %v248 = vpop.f32.mrb[0].mxu0
    %v249 = vadd.f32 %v82, %v248
    %v250 = vpop.f32.mrb[0].mxu0
    %251 = vmatprep.mubr.bf16.mxu0 0
    %252 = vmatmul.mubr.bf16.gmra.mrb[0].mxu0 %v179
    %v253 = vpop.f32.mrb[0].mxu0
    %v254 = vadd.f32 %v87, %v253
    %v255 = vpop.f32.mrb[0].mxu0
    %v256 = vpop.f32.mrb[0].mxu0
    %v257 = vadd.f32 %v92, %v256
    %v258 = vpop.f32.mrb[0].mxu0
    %259 = vmatprep.mubr.bf16.mxu0 0
    %260 = vmatmul.mubr.bf16.gmra.mrb[0].mxu0 %v182
    %v261 = vpop.f32.mrb[0].mxu0
    %v262 = vadd.f32 %v97, %v261
    %v263 = vpop.f32.mrb[0].mxu0
    %v264 = vpop.f32.mrb[0].mxu0
    %v265 = vadd.f32 %v102, %v264
    %v266 = vpop.f32.mrb[0].mxu0
    %267 = vmatprep.mubr.bf16.mxu0 0
    %268 = vmatmul.mubr.bf16.gmra.mrb[0].mxu0 %v185
    %v269 = vpop.f32.mrb[0].mxu0
    %v270 = vadd.f32 %v107, %v269
    %v271 = vpop.f32.mrb[0].mxu0
    %v272 = vpop.f32.mrb[0].mxu0
    %v273 = vadd.f32 %v112, %v272
    %v274 = vpop.f32.mrb[0].mxu0
    %275 = vdwg.mxu0
    %v276 = vpack.c.bf16 %v249, %v246
    %v277 = vpack.c.bf16 %v257, %v254
    %v278 = vpack.c.bf16 %v265, %v262
    %v279 = vpack.c.bf16 %v273, %v270
    %v280 = vmax.bf16 %v276, 0
    %v281 = vmax.bf16 %v277, 0
    %v282 = vmax.bf16 %v278, 0
    %v283 = vmax.bf16 %v279, 0
    %v284 = vld [vmem:[%s3] sm:$0xf]
    %v285 = vld [vmem:[%s3 + $0x4] sm:$0xf]
    %v286 = vld [vmem:[%s3 + $0x8] sm:$0xf]
    %v287 = vld [vmem:[%s3 + $0xc] sm:$0xf]
    %v288 = vld [vmem:[%s3 + $0x10] sm:$0xf]
    %v289 = vld [vmem:[%s3 + $0x14] sm:$0xf]
    %v290 = vld [vmem:[%s3 + $0x18] sm:$0xf]
    %v291 = vld [vmem:[%s3 + $0x1c] sm:$0xf]
    %v292 = vld [vmem:[%s4] sm:$0xff]
    %v293 = vld [vmem:[%s4 + $0x8] sm:$0xff]
    %v294 = vld [vmem:[%s4 + $0x10] sm:$0xff]
    %v295 = vld [vmem:[%s4 + $0x18] sm:$0xff]
    %v296 = vld [vmem:[%s4 + $0x20] sm:$0xff]
    %v297 = vld [vmem:[%s4 + $0x28] sm:$0xff]
    %v298 = vld [vmem:[%s4 + $0x30] sm:$0xff]
    %v299 = vld [vmem:[%s4 + $0x38] sm:$0xff]
    %301 = vset.pattern.permute.xlu0 0
    %302 = vperm.xlu0 %301, %v292
    %v303 = vpop.permute.xlu0 %302
    %306 = vset.pattern.permute.xlu0 0
    %307 = vperm.xlu0 %306, %v293
    %v308 = vpop.permute.xlu0 %307
    %311 = vset.pattern.permute.xlu0 0
    %312 = vperm.xlu0 %311, %v294
    %v313 = vpop.permute.xlu0 %312
    %316 = vset.pattern.permute.xlu0 0
    %317 = vperm.xlu0 %316, %v295
    %v318 = vpop.permute.xlu0 %317
    %321 = vset.pattern.permute.xlu0 0
    %322 = vperm.xlu0 %321, %v296
    %v323 = vpop.permute.xlu0 %322
    %326 = vset.pattern.permute.xlu0 0
    %327 = vperm.xlu0 %326, %v297
    %v328 = vpop.permute.xlu0 %327
    %331 = vset.pattern.permute.xlu0 0
    %332 = vperm.xlu0 %331, %v298
    %v333 = vpop.permute.xlu0 %332
    %336 = vset.pattern.permute.xlu0 0
    %337 = vperm.xlu0 %336, %v299
    %v338 = vpop.permute.xlu0 %337
    %v348 = vunpack.c.l.b16 %v284
    %v349 = vunpack.c.l.b16 %v285
    %v350 = vunpack.c.l.b16 %v286
    %v351 = vunpack.c.l.b16 %v287
    %v352 = vunpack.c.l.b16 %v288
    %v353 = vunpack.c.l.b16 %v289
    %v354 = vunpack.c.l.b16 %v290
    %v355 = vunpack.c.l.b16 %v291
    %v356 = vpack.c.b16 %v349, %v348
    %v357 = vpack.c.b16 %v351, %v350
    %v358 = vpack.c.b16 %v353, %v352
    %v359 = vpack.c.b16 %v355, %v354
    %vm360 = vcmask 523264
    %v362 = vsel %vm360, %v356, 0
    %v365 = vsel %vm360, %v357, 0
    %v368 = vsel %vm360, %v358, 0
    %v371 = vsel %vm360, %v359, 0
    %373 = vmatprep.subr.bf16.mxu0 0
    %374 = vmatpush1.bf16.msra.mxu0 %v280
    %375 = vmatprep.subr.bf16.mxu0 0
    %376 = vmatpush1.bf16.msra.mxu0 %v281
    %377 = vmatprep.subr.bf16.mxu0 0
    %378 = vmatpush1.bf16.msra.mxu0 %v282
    %379 = vmatprep.subr.bf16.mxu0 0
    %380 = vmatpush1.bf16.msra.mxu0 %v283
    %381 = vmatprep.subr.bf16.mxu0 0
    %382 = vmatpush1.bf16.msra.mxu0 0
    %383 = vmatprep.subr.bf16.mxu0 0
    %384 = vmatpush1.bf16.msra.mxu0 0
    %385 = vmatprep.subr.bf16.mxu0 0
    %386 = vmatpush1.bf16.msra.mxu0 0
    %387 = vmatprep.subr.bf16.mxu0 0
    %388 = vmatpush1.bf16.msra.mxu0 0
    %389 = vmatprep.subr.bf16.mxu0 0
    %390 = vmatpush1.bf16.msra.mxu0 0
    %391 = vmatprep.subr.bf16.mxu0 0
    %392 = vmatpush1.bf16.msra.mxu0 0
    %393 = vmatprep.subr.bf16.mxu0 0
    %394 = vmatpush1.bf16.msra.mxu0 0
    %395 = vmatprep.subr.bf16.mxu0 0
    %396 = vmatpush1.bf16.msra.mxu0 0
    %397 = vmatprep.subr.bf16.mxu0 0
    %398 = vmatpush1.bf16.msra.mxu0 0
    %399 = vmatprep.subr.bf16.mxu0 0
    %400 = vmatpush1.bf16.msra.mxu0 0
    %401 = vmatprep.subr.bf16.mxu0 0
    %402 = vmatpush1.bf16.msra.mxu0 0
    %403 = vmatprep.subr.bf16.mxu0 0
    %404 = vmatpush1.bf16.msra.mxu0 0
    %405 = vmatprep.mubr.bf16.mxu0 0
    %406 = vmatmul.mubr.bf16.gmra.mrb[0].mxu0 %v362
    %v407 = vpop.f32.mrb[0].mxu0
    %v408 = vadd.f32 %v303, %v407
    %v409 = vpop.f32.mrb[0].mxu0
    %v410 = vpop.f32.mrb[0].mxu0
    %v411 = vadd.f32 %v308, %v410
    %v412 = vpop.f32.mrb[0].mxu0
    %413 = vmatprep.mubr.bf16.mxu0 0
    %414 = vmatmul.mubr.bf16.gmra.mrb[0].mxu0 %v365
    %v415 = vpop.f32.mrb[0].mxu0
    %v416 = vadd.f32 %v313, %v415
    %v417 = vpop.f32.mrb[0].mxu0
    %v418 = vpop.f32.mrb[0].mxu0
    %v419 = vadd.f32 %v318, %v418
    %v420 = vpop.f32.mrb[0].mxu0
    %421 = vmatprep.mubr.bf16.mxu0 0
    %422 = vmatmul.mubr.bf16.gmra.mrb[0].mxu0 %v368
    %v423 = vpop.f32.mrb[0].mxu0
    %v424 = vadd.f32 %v323, %v423
    %v425 = vpop.f32.mrb[0].mxu0
    %v426 = vpop.f32.mrb[0].mxu0
    %v427 = vadd.f32 %v328, %v426
    %v428 = vpop.f32.mrb[0].mxu0
    %429 = vmatprep.mubr.bf16.mxu0 0
    %430 = vmatmul.mubr.bf16.gmra.mrb[0].mxu0 %v371
    %v431 = vpop.f32.mrb[0].mxu0
    %v432 = vadd.f32 %v333, %v431
    %v433 = vpop.f32.mrb[0].mxu0
    %v434 = vpop.f32.mrb[0].mxu0
    %v435 = vadd.f32 %v338, %v434
    %v436 = vpop.f32.mrb[0].mxu0
    %437 = vdwg.mxu0
    %v438 = vpack.c.bf16 %v411, %v408
    %v439 = vpack.c.bf16 %v419, %v416
    %v440 = vpack.c.bf16 %v427, %v424
    %v441 = vpack.c.bf16 %v435, %v432
    %v442 = vmax.bf16 %v438, 0
    %v443 = vmax.bf16 %v439, 0
    %v444 = vmax.bf16 %v440, 0
    %v445 = vmax.bf16 %v441, 0
    %v446 = vld [vmem:[%s5] sm:$0xf]
    %v447 = vld [vmem:[%s5 + $0x4] sm:$0xf]
    %v448 = vld [vmem:[%s5 + $0x8] sm:$0xf]
    %v449 = vld [vmem:[%s5 + $0xc] sm:$0xf]
    %v450 = vld [vmem:[%s5 + $0x10] sm:$0xf]
    %v451 = vld [vmem:[%s5 + $0x14] sm:$0xf]
    %v452 = vld [vmem:[%s5 + $0x18] sm:$0xf]
    %v453 = vld [vmem:[%s5 + $0x1c] sm:$0xf]
    %v454 = vld [vmem:[%s6] sm:$0xff]
    %v455 = vld [vmem:[%s6 + $0x8] sm:$0xff]
    %v456 = vld [vmem:[%s6 + $0x10] sm:$0xff]
    %v457 = vld [vmem:[%s6 + $0x18] sm:$0xff]
    %v458 = vld [vmem:[%s6 + $0x20] sm:$0xff]
    %v459 = vld [vmem:[%s6 + $0x28] sm:$0xff]
    %v460 = vld [vmem:[%s6 + $0x30] sm:$0xff]
    %v461 = vld [vmem:[%s6 + $0x38] sm:$0xff]
    %463 = vset.pattern.permute.xlu0 0
    %464 = vperm.xlu0 %463, %v454
    %v465 = vpop.permute.xlu0 %464
    %468 = vset.pattern.permute.xlu0 0
    %469 = vperm.xlu0 %468, %v455
    %v470 = vpop.permute.xlu0 %469
    %473 = vset.pattern.permute.xlu0 0
    %474 = vperm.xlu0 %473, %v456
    %v475 = vpop.permute.xlu0 %474
    %478 = vset.pattern.permute.xlu0 0
    %479 = vperm.xlu0 %478, %v457
    %v480 = vpop.permute.xlu0 %479
    %483 = vset.pattern.permute.xlu0 0
    %484 = vperm.xlu0 %483, %v458
    %v485 = vpop.permute.xlu0 %484
    %488 = vset.pattern.permute.xlu0 0
    %489 = vperm.xlu0 %488, %v459
    %v490 = vpop.permute.xlu0 %489
    %493 = vset.pattern.permute.xlu0 0
    %494 = vperm.xlu0 %493, %v460
    %v495 = vpop.permute.xlu0 %494
    %498 = vset.pattern.permute.xlu0 0
    %499 = vperm.xlu0 %498, %v461
    %v500 = vpop.permute.xlu0 %499
    %v510 = vunpack.c.l.b16 %v446
    %v511 = vunpack.c.l.b16 %v447
    %v512 = vunpack.c.l.b16 %v448
    %v513 = vunpack.c.l.b16 %v449
    %v514 = vunpack.c.l.b16 %v450
    %v515 = vunpack.c.l.b16 %v451
    %v516 = vunpack.c.l.b16 %v452
    %v517 = vunpack.c.l.b16 %v453
    %v518 = vpack.c.b16 %v511, %v510
    %v519 = vpack.c.b16 %v513, %v512
    %v520 = vpack.c.b16 %v515, %v514
    %v521 = vpack.c.b16 %v517, %v516
    %v523 = vsel %vm360, %v518, 0
    %v526 = vsel %vm360, %v519, 0
    %v529 = vsel %vm360, %v520, 0
    %v532 = vsel %vm360, %v521, 0
    %534 = vmatprep.subr.bf16.mxu0 0
    %535 = vmatpush1.bf16.msra.mxu0 %v442
    %536 = vmatprep.subr.bf16.mxu0 0
    %537 = vmatpush1.bf16.msra.mxu0 %v443
    %538 = vmatprep.subr.bf16.mxu0 0
    %539 = vmatpush1.bf16.msra.mxu0 %v444
    %540 = vmatprep.subr.bf16.mxu0 0
    %541 = vmatpush1.bf16.msra.mxu0 %v445
    %542 = vmatprep.subr.bf16.mxu0 0
    %543 = vmatpush1.bf16.msra.mxu0 0
    %544 = vmatprep.subr.bf16.mxu0 0
    %545 = vmatpush1.bf16.msra.mxu0 0
    %546 = vmatprep.subr.bf16.mxu0 0
    %547 = vmatpush1.bf16.msra.mxu0 0
    %548 = vmatprep.subr.bf16.mxu0 0
    %549 = vmatpush1.bf16.msra.mxu0 0
    %550 = vmatprep.subr.bf16.mxu0 0
    %551 = vmatpush1.bf16.msra.mxu0 0
    %552 = vmatprep.subr.bf16.mxu0 0
    %553 = vmatpush1.bf16.msra.mxu0 0
    %554 = vmatprep.subr.bf16.mxu0 0
    %555 = vmatpush1.bf16.msra.mxu0 0
    %556 = vmatprep.subr.bf16.mxu0 0
    %557 = vmatpush1.bf16.msra.mxu0 0
    %558 = vmatprep.subr.bf16.mxu0 0
    %559 = vmatpush1.bf16.msra.mxu0 0
    %560 = vmatprep.subr.bf16.mxu0 0
    %561 = vmatpush1.bf16.msra.mxu0 0
    %562 = vmatprep.subr.bf16.mxu0 0
    %563 = vmatpush1.bf16.msra.mxu0 0
    %564 = vmatprep.subr.bf16.mxu0 0
    %565 = vmatpush1.bf16.msra.mxu0 0
    %566 = vmatprep.mubr.bf16.mxu0 0
    %567 = vmatmul.mubr.bf16.gmra.mrb[0].mxu0 %v523
    %v568 = vpop.f32.mrb[0].mxu0
    %v569 = vadd.f32 %v465, %v568
    %v570 = vpop.f32.mrb[0].mxu0
    %v571 = vpop.f32.mrb[0].mxu0
    %v572 = vadd.f32 %v470, %v571
    %v573 = vpop.f32.mrb[0].mxu0
    %574 = vmatprep.mubr.bf16.mxu0 0
    %575 = vmatmul.mubr.bf16.gmra.mrb[0].mxu0 %v526
    %v576 = vpop.f32.mrb[0].mxu0
    %v577 = vadd.f32 %v475, %v576
    %v578 = vpop.f32.mrb[0].mxu0
    %v579 = vpop.f32.mrb[0].mxu0
    %v580 = vadd.f32 %v480, %v579
    %v581 = vpop.f32.mrb[0].mxu0
    %582 = vmatprep.mubr.bf16.mxu0 0
    %583 = vmatmul.mubr.bf16.gmra.mrb[0].mxu0 %v529
    %v584 = vpop.f32.mrb[0].mxu0
    %v585 = vadd.f32 %v485, %v584
    %v586 = vpop.f32.mrb[0].mxu0
    %v587 = vpop.f32.mrb[0].mxu0
    %v588 = vadd.f32 %v490, %v587
    %v589 = vpop.f32.mrb[0].mxu0
    %590 = vmatprep.mubr.bf16.mxu0 0
    %591 = vmatmul.mubr.bf16.gmra.mrb[0].mxu0 %v532
    %v592 = vpop.f32.mrb[0].mxu0
    %v593 = vadd.f32 %v495, %v592
    %v594 = vpop.f32.mrb[0].mxu0
    %v595 = vpop.f32.mrb[0].mxu0
    %v596 = vadd.f32 %v500, %v595
    %v597 = vpop.f32.mrb[0].mxu0
    %598 = vdwg.mxu0
    %v599 = vpack.c.bf16 %v572, %v569
    %v600 = vpack.c.bf16 %v580, %v577
    %v601 = vpack.c.bf16 %v588, %v585
    %v602 = vpack.c.bf16 %v596, %v593
    %v603 = vmax.bf16 %v599, 0
    %v604 = vmax.bf16 %v600, 0
    %v605 = vmax.bf16 %v601, 0
    %v606 = vmax.bf16 %v602, 0
    %v607 = vld [vmem:[%s7] sm:$0xf]
    %v608 = vld [vmem:[%s7 + $0x4] sm:$0xf]
    %v609 = vld [vmem:[%s7 + $0x8] sm:$0xf]
    %v610 = vld [vmem:[%s7 + $0xc] sm:$0xf]
    %v611 = vld [vmem:[%s7 + $0x10] sm:$0xf]
    %v612 = vld [vmem:[%s7 + $0x14] sm:$0xf]
    %v613 = vld [vmem:[%s7 + $0x18] sm:$0xf]
    %v614 = vld [vmem:[%s7 + $0x1c] sm:$0xf]
    %v615 = vld [vmem:[%s8] sm:$0xff]
    %v616 = vld [vmem:[%s8 + $0x8] sm:$0xff]
    %v617 = vld [vmem:[%s8 + $0x10] sm:$0xff]
    %v618 = vld [vmem:[%s8 + $0x18] sm:$0xff]
    %v619 = vld [vmem:[%s8 + $0x20] sm:$0xff]
    %v620 = vld [vmem:[%s8 + $0x28] sm:$0xff]
    %v621 = vld [vmem:[%s8 + $0x30] sm:$0xff]
    %v622 = vld [vmem:[%s8 + $0x38] sm:$0xff]
    %624 = vset.pattern.permute.xlu0 0
    %625 = vperm.xlu0 %624, %v615
    %v626 = vpop.permute.xlu0 %625
    %629 = vset.pattern.permute.xlu0 0
    %630 = vperm.xlu0 %629, %v616
    %v631 = vpop.permute.xlu0 %630
    %634 = vset.pattern.permute.xlu0 0
    %635 = vperm.xlu0 %634, %v617
    %v636 = vpop.permute.xlu0 %635
    %639 = vset.pattern.permute.xlu0 0
    %640 = vperm.xlu0 %639, %v618
    %v641 = vpop.permute.xlu0 %640
    %644 = vset.pattern.permute.xlu0 0
    %645 = vperm.xlu0 %644, %v619
    %v646 = vpop.permute.xlu0 %645
    %649 = vset.pattern.permute.xlu0 0
    %650 = vperm.xlu0 %649, %v620
    %v651 = vpop.permute.xlu0 %650
    %654 = vset.pattern.permute.xlu0 0
    %655 = vperm.xlu0 %654, %v621
    %v656 = vpop.permute.xlu0 %655
    %659 = vset.pattern.permute.xlu0 0
    %660 = vperm.xlu0 %659, %v622
    %v661 = vpop.permute.xlu0 %660
    %v671 = vunpack.c.l.b16 %v607
    %v672 = vunpack.c.l.b16 %v608
    %v673 = vunpack.c.l.b16 %v609
    %v674 = vunpack.c.l.b16 %v610
    %v675 = vunpack.c.l.b16 %v611
    %v676 = vunpack.c.l.b16 %v612
    %v677 = vunpack.c.l.b16 %v613
    %v678 = vunpack.c.l.b16 %v614
    %v679 = vpack.c.b16 %v672, %v671
    %v680 = vpack.c.b16 %v674, %v673
    %v681 = vpack.c.b16 %v676, %v675
    %v682 = vpack.c.b16 %v678, %v677
    %v684 = vsel %vm360, %v679, 0
    %v687 = vsel %vm360, %v680, 0
    %v690 = vsel %vm360, %v681, 0
    %v693 = vsel %vm360, %v682, 0
    %695 = vmatprep.subr.bf16.mxu0 0
    %696 = vmatpush1.bf16.msra.mxu0 %v603
    %697 = vmatprep.subr.bf16.mxu0 0
    %698 = vmatpush1.bf16.msra.mxu0 %v604
    %699 = vmatprep.subr.bf16.mxu0 0
    %700 = vmatpush1.bf16.msra.mxu0 %v605
    %701 = vmatprep.subr.bf16.mxu0 0
    %702 = vmatpush1.bf16.msra.mxu0 %v606
    %703 = vmatprep.subr.bf16.mxu0 0
    %704 = vmatpush1.bf16.msra.mxu0 0
    %705 = vmatprep.subr.bf16.mxu0 0
    %706 = vmatpush1.bf16.msra.mxu0 0
    %707 = vmatprep.subr.bf16.mxu0 0
    %708 = vmatpush1.bf16.msra.mxu0 0
    %709 = vmatprep.subr.bf16.mxu0 0
    %710 = vmatpush1.bf16.msra.mxu0 0
    %711 = vmatprep.subr.bf16.mxu0 0
    %712 = vmatpush1.bf16.msra.mxu0 0
    %713 = vmatprep.subr.bf16.mxu0 0
    %714 = vmatpush1.bf16.msra.mxu0 0
    %715 = vmatprep.subr.bf16.mxu0 0
    %716 = vmatpush1.bf16.msra.mxu0 0
    %717 = vmatprep.subr.bf16.mxu0 0
    %718 = vmatpush1.bf16.msra.mxu0 0
    %719 = vmatprep.subr.bf16.mxu0 0
    %720 = vmatpush1.bf16.msra.mxu0 0
    %721 = vmatprep.subr.bf16.mxu0 0
    %722 = vmatpush1.bf16.msra.mxu0 0
    %723 = vmatprep.subr.bf16.mxu0 0
    %724 = vmatpush1.bf16.msra.mxu0 0
    %725 = vmatprep.subr.bf16.mxu0 0
    %726 = vmatpush1.bf16.msra.mxu0 0
    %727 = vmatprep.mubr.bf16.mxu0 0
    %728 = vmatmul.mubr.bf16.gmra.mrb[0].mxu0 %v684
    %v729 = vpop.f32.mrb[0].mxu0
    %v730 = vadd.f32 %v626, %v729
    %v731 = vpop.f32.mrb[0].mxu0
    %v732 = vpop.f32.mrb[0].mxu0
    %v733 = vadd.f32 %v631, %v732
    %v734 = vpop.f32.mrb[0].mxu0
    %735 = vmatprep.mubr.bf16.mxu0 0
    %736 = vmatmul.mubr.bf16.gmra.mrb[0].mxu0 %v687
    %v737 = vpop.f32.mrb[0].mxu0
    %v738 = vadd.f32 %v636, %v737
    %v739 = vpop.f32.mrb[0].mxu0
    %v740 = vpop.f32.mrb[0].mxu0
    %v741 = vadd.f32 %v641, %v740
    %v742 = vpop.f32.mrb[0].mxu0
    %743 = vmatprep.mubr.bf16.mxu0 0
    %744 = vmatmul.mubr.bf16.gmra.mrb[0].mxu0 %v690
    %v745 = vpop.f32.mrb[0].mxu0
    %v746 = vadd.f32 %v646, %v745
    %v747 = vpop.f32.mrb[0].mxu0
    %v748 = vpop.f32.mrb[0].mxu0
    %v749 = vadd.f32 %v651, %v748
    %v750 = vpop.f32.mrb[0].mxu0
    %751 = vmatprep.mubr.bf16.mxu0 0
    %752 = vmatmul.mubr.bf16.gmra.mrb[0].mxu0 %v693
    %v753 = vpop.f32.mrb[0].mxu0
    %v754 = vadd.f32 %v656, %v753
    %v755 = vpop.f32.mrb[0].mxu0
    %v756 = vpop.f32.mrb[0].mxu0
    %v757 = vadd.f32 %v661, %v756
    %v758 = vpop.f32.mrb[0].mxu0
    %759 = vdwg.mxu0
    %v760 = vpack.c.bf16 %v733, %v730
    %v761 = vpack.c.bf16 %v741, %v738
    %v762 = vpack.c.bf16 %v749, %v746
    %v763 = vpack.c.bf16 %v757, %v754
    %v764 = vmax.bf16 %v760, 0
    %v765 = vmax.bf16 %v761, 0
    %v766 = vmax.bf16 %v762, 0
    %v767 = vmax.bf16 %v763, 0
    %v768 = vld [vmem:[%s9] sm:$0x1]
    %v769 = vld [vmem:[#allocation2] sm:$0x1]
    %771 = vset.pattern.permute.xlu0 0
    %772 = vperm.xlu0 %771, %v769
    %v773 = vpop.permute.xlu0 %772
    %v775 = vlaneseq
    %v776 = vshrl.u32 %v775, 7
    %v777 = vsub.s32 0, %v776
    %v778 = vrot.slane %v773, %v777
    %v780 = vsel %vm360, %v768, 0
    %782 = vmatprep.subr.bf16.mxu0 0
    %783 = vmatpush1.bf16.msra.mxu0 %v764
    %784 = vmatprep.subr.bf16.mxu0 0
    %785 = vmatpush1.bf16.msra.mxu0 %v765
    %786 = vmatprep.subr.bf16.mxu0 0
    %787 = vmatpush1.bf16.msra.mxu0 %v766
    %788 = vmatprep.subr.bf16.mxu0 0
    %789 = vmatpush1.bf16.msra.mxu0 %v767
    %790 = vmatprep.subr.bf16.mxu0 0
    %791 = vmatpush1.bf16.msra.mxu0 0
    %792 = vmatprep.subr.bf16.mxu0 0
    %793 = vmatpush1.bf16.msra.mxu0 0
    %794 = vmatprep.subr.bf16.mxu0 0
    %795 = vmatpush1.bf16.msra.mxu0 0
    %796 = vmatprep.subr.bf16.mxu0 0
    %797 = vmatpush1.bf16.msra.mxu0 0
    %798 = vmatprep.subr.bf16.mxu0 0
    %799 = vmatpush1.bf16.msra.mxu0 0
    %800 = vmatprep.subr.bf16.mxu0 0
    %801 = vmatpush1.bf16.msra.mxu0 0
    %802 = vmatprep.subr.bf16.mxu0 0
    %803 = vmatpush1.bf16.msra.mxu0 0
    %804 = vmatprep.subr.bf16.mxu0 0
    %805 = vmatpush1.bf16.msra.mxu0 0
    %806 = vmatprep.subr.bf16.mxu0 0
    %807 = vmatpush1.bf16.msra.mxu0 0
    %808 = vmatprep.subr.bf16.mxu0 0
    %809 = vmatpush1.bf16.msra.mxu0 0
    %810 = vmatprep.subr.bf16.mxu0 0
    %811 = vmatpush1.bf16.msra.mxu0 0
    %812 = vmatprep.subr.bf16.mxu0 0
    %813 = vmatpush1.bf16.msra.mxu0 0
    %814 = vmatprep.mubr.bf16.mxu0 0
    %815 = vmatmul.mubr.bf16.gmra.mrb[0].mxu0 %v780
    %v816 = vpop.f32.mrb[0].mxu0
    %v817 = vadd.f32 %v778, %v816
    %v818 = vpop.f32.mrb[0].mxu0
    %v819 = vpop.f32.mrb[0].mxu0
    %v820 = vpop.f32.mrb[0].mxu0
    %821 = vdwg.mxu0
    %822 = vst [vmem:[#allocation3] sm:$0x1] %v817
    // Predicated region
    $region46: #{tpu_custom_call.1} parent=1 // pred_check
      _
    $region47: #{tpu_custom_call.1} parent=1 // pred_check_branch
      %824 = sbr.rel (0) target = $region49
    $region48: #{tpu_custom_call.1} parent=1 // pred_region
      %s826 = ssub.s32 16, 16
      %827 = vsyncadd [#allocation4], %s826
      %s829 = sshll.u32 [#allocation3], 4
      %s830 = int_to_ptr.vmem [resolvable:$true] %s829
      %832 = dma.vmem_to_hbm [thread:$0]  %s830, 16, %s11, [#allocation4]
    $region49: #{tpu_custom_call.1} parent=1 // pred_fallthru
      _
    // Predicated region
    $region50: #{tpu_custom_call.1} parent=1 // pred_check
      _
    $region51: #{tpu_custom_call.1} parent=1 // pred_check_branch
      %834 = sbr.rel (0) target = $region53
    $region52: #{tpu_custom_call.1} parent=1 // pred_region
      %835 = dma.done [#allocation4], 16
    $region53: #{tpu_custom_call.1} parent=1 // pred_fallthru
      _
    %836 = vsyncpa [#allocation4], 1

</llo_original>
